<compile_context>
chip_gen: v5e
topology: v5e:2x2
jax: 0.10.0
libtpu: 0.0.40
codegen_flags: <defaults>
</compile_context>

<pallas_src>
import jax
import jax.numpy as jnp
from jax.experimental import pallas as pl
from jax.experimental.pallas import tpu as pltpu

EPS = 1e-5


def _make_kernel(C, H, W, compute_dtype):
    P = H * W

    def kernel(border_ref, x_ref, w1_ref, w2_ref, o_ref, tap_ref):
        x = x_ref[0]                                    # (C, P) f32

        # Border masks, kept at (1, P); jnp.where broadcasts them along the
        # sublane (channel) axis for free.  Rows: [i==0, i==H-1, j==0, j==W-1].
        is_i0 = border_ref[0:1, :] != 0
        is_iH = border_ref[1:2, :] != 0
        is_j0 = border_ref[2:3, :] != 0
        is_jW = border_ref[3:4, :] != 0

        def fill_taps(t):
            # Writes the 9 reflection-padded 3x3 taps of t (C, P) into the
            # f32 tap scratch (9*C, P), tap-major: rows [tap*C, tap*C + C),
            # tap = di*3 + dj.  All shifts / fix-ups stay f32 (safe on v5e).
            up = pltpu.roll(t, W, 1)        # value at row i-1 (wraps at i==0)
            dn = pltpu.roll(t, P - W, 1)    # value at row i+1 (wraps at i==H-1)
            vshifts = (jnp.where(is_i0, dn, up),   # di=0: reflect r(-1) = 1
                       t,                          # di=1
                       jnp.where(is_iH, up, dn))   # di=2: reflect r(H)  = H-2
            for di, tv in enumerate(vshifts):
                lt = pltpu.roll(tv, 1, 1)       # col j-1 (wraps at j==0)
                rt = pltpu.roll(tv, P - 1, 1)   # col j+1 (wraps at j==W-1)
                hshifts = (jnp.where(is_j0, rt, lt),   # dj=0: reflect r(-1)=1
                           tv,                         # dj=1
                           jnp.where(is_jW, lt, rt))   # dj=2: reflect r(W)=W-2
                for dj, tap in enumerate(hshifts):
                    r = (di * 3 + dj) * C
                    tap_ref[r:r + C, :] = tap

        def conv3x3(t, w_ref):
            # Reflection-padded 3x3 conv as a single fused MXU matmul:
            # (C_out, 9*C_in) @ (9*C_in, P), f32 accumulation.  The tap matrix
            # is cast to compute_dtype exactly once per conv.  Bias omitted on
            # purpose: exactly cancelled by the following InstanceNorm.
            fill_taps(t)
            return jnp.dot(w_ref[...],
                           tap_ref[...].astype(compute_dtype),
                           preferred_element_type=jnp.float32)

        def instance_norm(y):
            # Single-pass stats: sum and sum-of-squares in one traversal.
            s1 = jnp.sum(y, axis=1, keepdims=True)
            s2 = jnp.sum(y * y, axis=1, keepdims=True)
            mean = s1 * (1.0 / P)
            var = jnp.maximum(s2 * (1.0 / P) - mean * mean, 0.0)
            return (y - mean) * jax.lax.rsqrt(var + EPS)

        y = jnp.maximum(instance_norm(conv3x3(x, w1_ref)), 0.0)   # conv1+IN+ReLU
        y = instance_norm(conv3x3(y, w2_ref))                     # conv2+IN
        o_ref[0] = x + y                                          # residual add

    return kernel


def residual_block(x, w1, b1, w2, b2, *, compute_dtype=jnp.bfloat16):
    """x: (N, C, H, W) f32; w*: (C, C, 3, 3) OIHW; b*: (C,).

    b1/b2 are accepted for API parity but intentionally unused: InstanceNorm2d
    (affine=False) directly follows each conv and subtracts the per-channel
    spatial mean, so the conv bias cancels exactly.
    """
    del b1, b2
    N, C, H, W = x.shape
    P = H * W

    # Lane-dense activations: last dim H*W (multiple of 128 for typical sizes).
    x_flat = x.reshape(N, C, P).astype(jnp.float32)

    # Fused weights: (C_out, 9*C_in), column = (di*3 + dj)*C_in + c_in, matching
    # the tap-major (9*C_in, P) tap matrix built in-kernel.  One dense tile per
    # conv instead of nine separately padded (C, C) tiles.
    def fuse_w(w):
        return jnp.transpose(w, (0, 2, 3, 1)).reshape(C, 9 * C).astype(compute_dtype)

    w1_f = fuse_w(w1)
    w2_f = fuse_w(w2)

    # Border masks for the in-kernel reflection fix-up (avoids integer div/mod
    # on the VPU): rows = [i==0, i==H-1, j==0, j==W-1] over the flat index.
    k = jnp.arange(P, dtype=jnp.int32)
    row, col = k // W, k % W
    border = jnp.stack(
        [row == 0, row == H - 1, col == 0, col == W - 1]).astype(jnp.int32)

    out_flat = pl.pallas_call(
        _make_kernel(C, H, W, compute_dtype),
        out_shape=jax.ShapeDtypeStruct((N, C, P), jnp.float32),
        grid_spec=pltpu.PrefetchScalarGridSpec(
            num_scalar_prefetch=0,
            grid=(N,),                                         # batch axis
            in_specs=[
                pl.BlockSpec((4, P), lambda n: (0, 0)),         # border masks
                pl.BlockSpec((1, C, P), lambda n: (n, 0, 0)),   # x (lane-dense)
                pl.BlockSpec((C, 9 * C), lambda n: (0, 0)),     # conv1 fused W
                pl.BlockSpec((C, 9 * C), lambda n: (0, 0)),     # conv2 fused W
            ],
            out_specs=pl.BlockSpec((1, C, P), lambda n: (n, 0, 0)),
            scratch_shapes=[
                pltpu.VMEM((9 * C, P), jnp.float32),            # fused tap matrix
            ],
        ),
        compiler_params=pltpu.CompilerParams(
            dimension_semantics=("parallel",),     # feeds both TCs on v7x (N>=2)
            vmem_limit_bytes=48 * 1024 * 1024,     # fits v7x 64 MiB; raise on v5e/v6e
        ),
    )(border, x_flat, w1_f, w2_f)
    return out_flat.reshape(N, C, H, W)


def residual_block_reference(x, w1, b1, w2, b2):
    """Pure-JAX reference matching the PyTorch module semantics (f32, exact conv)."""
    def conv(t, w, b):
        tp = jnp.pad(t, ((0, 0), (0, 0), (1, 1), (1, 1)), mode="reflect")
        y = jax.lax.conv_general_dilated(
            tp, w, window_strides=(1, 1), padding="VALID",
            dimension_numbers=("NCHW", "OIHW", "NCHW"),
            precision=jax.lax.Precision.HIGHEST)
        return y + b[None, :, None, None]

    def inorm(y):
        m = y.mean(axis=(2, 3), keepdims=True)
        v = ((y - m) ** 2).mean(axis=(2, 3), keepdims=True)
        return (y - m) / jnp.sqrt(v + EPS)

    y = jax.nn.relu(inorm(conv(x, w1, b1)))
    y = inorm(conv(y, w2, b2))
    return x + y


if __name__ == "__main__":
    N, C, H, W = 2, 4, 16, 16

    key = jax.random.PRNGKey(0)
    kx, kw1, kb1, kw2, kb2 = jax.random.split(key, 5)

    x = jax.random.normal(kx, (N, C, H, W), dtype=jnp.float32)

    # Deterministic "PyTorch-like" init: uniform(-k, k), k = 1/sqrt(C*3*3)
    fan_in = C * 3 * 3
    bound = 1.0 / (fan_in ** 0.5)
    w1 = jax.random.uniform(kw1, (C, C, 3, 3), jnp.float32, -bound, bound)
    b1 = jax.random.uniform(kb1, (C,), jnp.float32, -bound, bound)
    w2 = jax.random.uniform(kw2, (C, C, 3, 3), jnp.float32, -bound, bound)
    b2 = jax.random.uniform(kb2, (C,), jnp.float32, -bound, bound)

    ref = jax.block_until_ready(residual_block_reference(x, w1, b1, w2, b2))

    # f32 MXU validation path: should match the reference tightly.
    out_f32 = jax.block_until_ready(
        residual_block(x, w1, b1, w2, b2, compute_dtype=jnp.float32))
    assert out_f32.shape == (N, C, H, W)
    err_f32 = float(jnp.max(jnp.abs(out_f32 - ref)))
    assert err_f32 < 2e-4, f"f32 kernel mismatch vs reference: {err_f32}"

    # Default path: bf16 MXU operands (native on v5e/v6e/v7x); stats / norm /
    # residual stay f32, so only matmul-operand rounding differs.
    out_bf16 = jax.block_until_ready(residual_block(x, w1, b1, w2, b2))
    assert out_bf16.shape == (N, C, H, W)
    err_bf16 = float(jnp.max(jnp.abs(out_bf16 - ref)))
    assert err_bf16 < 1.5e-1, f"bf16 kernel mismatch vs reference: {err_bf16}"

    print("KERNEL_OK")
</pallas_src>

<mosaic_0001>
module attributes {stable_mosaic.version = 11 : i64} {
  func.func @kernel(%arg0: i32, %arg1: memref<4x256xi32, #tpu.memory_space<vmem>>, %arg2: memref<1x4x256xf32, #tpu.memory_space<vmem>>, %arg3: memref<4x36xf32, #tpu.memory_space<vmem>>, %arg4: memref<4x36xf32, #tpu.memory_space<vmem>>, %arg5: memref<1x4x256xf32, #tpu.memory_space<vmem>>, %arg6: memref<36x256xf32, #tpu.memory_space<vmem>>) attributes {dimension_semantics = [#tpu.dimension_semantics<parallel>], iteration_bounds = array<i64: 2>, scalar_prefetch = 0 : i64, scratch_operands = 1 : i64, tpu.core_type = #tpu.core_type<tc>, window_params = [{pipeline_mode = #tpu.pipeline_mode<synchronous>, transform_indices = @transform_0, window_bounds = array<i64: 4, 256>}, {transform_indices = @transform_1, window_bounds = array<i64: 1, 4, 256>}, {pipeline_mode = #tpu.pipeline_mode<synchronous>, transform_indices = @transform_2, window_bounds = array<i64: 4, 36>}, {pipeline_mode = #tpu.pipeline_mode<synchronous>, transform_indices = @transform_3, window_bounds = array<i64: 4, 36>}, {transform_indices = @transform_4, window_bounds = array<i64: 1, 4, 256>}]} {
    %c0 = arith.constant 0 : index
    %c0_0 = arith.constant 0 : index
    %c0_1 = arith.constant 0 : index
    %0 = vector.load %arg2[%c0, %c0_0, %c0_1] : memref<1x4x256xf32, #tpu.memory_space<vmem>>, vector<1x4x256xf32>
    %1 = vector.shape_cast %0 : vector<1x4x256xf32> to vector<4x256xf32>
    %c0_2 = arith.constant 0 : index
    %c0_3 = arith.constant 0 : index
    %2 = vector.load %arg1[%c0_2, %c0_3] : memref<4x256xi32, #tpu.memory_space<vmem>>, vector<1x256xi32>
    %c0_i32 = arith.constant 0 : i32
    %3 = vector.broadcast %c0_i32 : i32 to vector<1x256xi32>
    %4 = arith.cmpi ne, %2, %3 : vector<1x256xi32>
    %c1 = arith.constant 1 : index
    %c0_4 = arith.constant 0 : index
    %5 = vector.load %arg1[%c1, %c0_4] : memref<4x256xi32, #tpu.memory_space<vmem>>, vector<1x256xi32>
    %c0_i32_5 = arith.constant 0 : i32
    %6 = vector.broadcast %c0_i32_5 : i32 to vector<1x256xi32>
    %7 = arith.cmpi ne, %5, %6 : vector<1x256xi32>
    %c2 = arith.constant 2 : index
    %c0_6 = arith.constant 0 : index
    %8 = vector.load %arg1[%c2, %c0_6] : memref<4x256xi32, #tpu.memory_space<vmem>>, vector<1x256xi32>
    %c0_i32_7 = arith.constant 0 : i32
    %9 = vector.broadcast %c0_i32_7 : i32 to vector<1x256xi32>
    %10 = arith.cmpi ne, %8, %9 : vector<1x256xi32>
    %c3 = arith.constant 3 : index
    %c0_8 = arith.constant 0 : index
    %11 = vector.load %arg1[%c3, %c0_8] : memref<4x256xi32, #tpu.memory_space<vmem>>, vector<1x256xi32>
    %c0_i32_9 = arith.constant 0 : i32
    %12 = vector.broadcast %c0_i32_9 : i32 to vector<1x256xi32>
    %13 = arith.cmpi ne, %11, %12 : vector<1x256xi32>
    %c16_i32 = arith.constant 16 : i32
    %14 = tpu.dynamic_rotate %1 by %c16_i32 dim 1 : vector<4x256xf32>, i32 -> vector<4x256xf32>
    %c240_i32 = arith.constant 240 : i32
    %15 = tpu.dynamic_rotate %1 by %c240_i32 dim 1 : vector<4x256xf32>, i32 -> vector<4x256xf32>
    %16 = vector.shape_cast %4 : vector<1x256xi1> to vector<1x256xi1>
    %17 = vector.broadcast %16 : vector<1x256xi1> to vector<4x256xi1>
    %18 = arith.select %17, %15, %14 : vector<4x256xi1>, vector<4x256xf32>
    %19 = vector.shape_cast %7 : vector<1x256xi1> to vector<1x256xi1>
    %20 = vector.broadcast %19 : vector<1x256xi1> to vector<4x256xi1>
    %21 = arith.select %20, %14, %15 : vector<4x256xi1>, vector<4x256xf32>
    %c1_i32 = arith.constant 1 : i32
    %22 = tpu.dynamic_rotate %18 by %c1_i32 dim 1 : vector<4x256xf32>, i32 -> vector<4x256xf32>
    %c255_i32 = arith.constant 255 : i32
    %23 = tpu.dynamic_rotate %18 by %c255_i32 dim 1 : vector<4x256xf32>, i32 -> vector<4x256xf32>
    %24 = vector.shape_cast %10 : vector<1x256xi1> to vector<1x256xi1>
    %25 = vector.broadcast %24 : vector<1x256xi1> to vector<4x256xi1>
    %26 = arith.select %25, %23, %22 : vector<4x256xi1>, vector<4x256xf32>
    %27 = vector.shape_cast %13 : vector<1x256xi1> to vector<1x256xi1>
    %28 = vector.broadcast %27 : vector<1x256xi1> to vector<4x256xi1>
    %29 = arith.select %28, %22, %23 : vector<4x256xi1>, vector<4x256xf32>
    %c0_10 = arith.constant 0 : index
    %c0_11 = arith.constant 0 : index
    %30 = vector.load %arg6[%c0_10, %c0_11] : memref<36x256xf32, #tpu.memory_space<vmem>>, vector<4x256xf32>
    tpu.vector_store %arg6[%c0_10, %c0_11], %26 {strides = array<i32>} : memref<36x256xf32, #tpu.memory_space<vmem>>, vector<4x256xf32>,
    %c4 = arith.constant 4 : index
    %c0_12 = arith.constant 0 : index
    %31 = vector.load %arg6[%c4, %c0_12] : memref<36x256xf32, #tpu.memory_space<vmem>>, vector<4x256xf32>
    tpu.vector_store %arg6[%c4, %c0_12], %18 {strides = array<i32>} : memref<36x256xf32, #tpu.memory_space<vmem>>, vector<4x256xf32>,
    %c8 = arith.constant 8 : index
    %c0_13 = arith.constant 0 : index
    %32 = vector.load %arg6[%c8, %c0_13] : memref<36x256xf32, #tpu.memory_space<vmem>>, vector<4x256xf32>
    tpu.vector_store %arg6[%c8, %c0_13], %29 {strides = array<i32>} : memref<36x256xf32, #tpu.memory_space<vmem>>, vector<4x256xf32>,
    %c1_i32_14 = arith.constant 1 : i32
    %33 = tpu.dynamic_rotate %1 by %c1_i32_14 dim 1 : vector<4x256xf32>, i32 -> vector<4x256xf32>
    %c255_i32_15 = arith.constant 255 : i32
    %34 = tpu.dynamic_rotate %1 by %c255_i32_15 dim 1 : vector<4x256xf32>, i32 -> vector<4x256xf32>
    %35 = vector.shape_cast %10 : vector<1x256xi1> to vector<1x256xi1>
    %36 = vector.broadcast %35 : vector<1x256xi1> to vector<4x256xi1>
    %37 = arith.select %36, %34, %33 : vector<4x256xi1>, vector<4x256xf32>
    %38 = vector.shape_cast %13 : vector<1x256xi1> to vector<1x256xi1>
    %39 = vector.broadcast %38 : vector<1x256xi1> to vector<4x256xi1>
    %40 = arith.select %39, %33, %34 : vector<4x256xi1>, vector<4x256xf32>
    %c12 = arith.constant 12 : index
    %c0_16 = arith.constant 0 : index
    %41 = vector.load %arg6[%c12, %c0_16] : memref<36x256xf32, #tpu.memory_space<vmem>>, vector<4x256xf32>
    tpu.vector_store %arg6[%c12, %c0_16], %37 {strides = array<i32>} : memref<36x256xf32, #tpu.memory_space<vmem>>, vector<4x256xf32>,
    %c16 = arith.constant 16 : index
    %c0_17 = arith.constant 0 : index
    %42 = vector.load %arg6[%c16, %c0_17] : memref<36x256xf32, #tpu.memory_space<vmem>>, vector<4x256xf32>
    tpu.vector_store %arg6[%c16, %c0_17], %1 {strides = array<i32>} : memref<36x256xf32, #tpu.memory_space<vmem>>, vector<4x256xf32>,
    %c20 = arith.constant 20 : index
    %c0_18 = arith.constant 0 : index
    %43 = vector.load %arg6[%c20, %c0_18] : memref<36x256xf32, #tpu.memory_space<vmem>>, vector<4x256xf32>
    tpu.vector_store %arg6[%c20, %c0_18], %40 {strides = array<i32>} : memref<36x256xf32, #tpu.memory_space<vmem>>, vector<4x256xf32>,
    %c1_i32_19 = arith.constant 1 : i32
    %44 = tpu.dynamic_rotate %21 by %c1_i32_19 dim 1 : vector<4x256xf32>, i32 -> vector<4x256xf32>
    %c255_i32_20 = arith.constant 255 : i32
    %45 = tpu.dynamic_rotate %21 by %c255_i32_20 dim 1 : vector<4x256xf32>, i32 -> vector<4x256xf32>
    %46 = vector.shape_cast %10 : vector<1x256xi1> to vector<1x256xi1>
    %47 = vector.broadcast %46 : vector<1x256xi1> to vector<4x256xi1>
    %48 = arith.select %47, %45, %44 : vector<4x256xi1>, vector<4x256xf32>
    %49 = vector.shape_cast %13 : vector<1x256xi1> to vector<1x256xi1>
    %50 = vector.broadcast %49 : vector<1x256xi1> to vector<4x256xi1>
    %51 = arith.select %50, %44, %45 : vector<4x256xi1>, vector<4x256xf32>
    %c24 = arith.constant 24 : index
    %c0_21 = arith.constant 0 : index
    %52 = vector.load %arg6[%c24, %c0_21] : memref<36x256xf32, #tpu.memory_space<vmem>>, vector<4x256xf32>
    tpu.vector_store %arg6[%c24, %c0_21], %48 {strides = array<i32>} : memref<36x256xf32, #tpu.memory_space<vmem>>, vector<4x256xf32>,
    %c28 = arith.constant 28 : index
    %c0_22 = arith.constant 0 : index
    %53 = vector.load %arg6[%c28, %c0_22] : memref<36x256xf32, #tpu.memory_space<vmem>>, vector<4x256xf32>
    tpu.vector_store %arg6[%c28, %c0_22], %21 {strides = array<i32>} : memref<36x256xf32, #tpu.memory_space<vmem>>, vector<4x256xf32>,
    %c32 = arith.constant 32 : index
    %c0_23 = arith.constant 0 : index
    %54 = vector.load %arg6[%c32, %c0_23] : memref<36x256xf32, #tpu.memory_space<vmem>>, vector<4x256xf32>
    tpu.vector_store %arg6[%c32, %c0_23], %51 {strides = array<i32>} : memref<36x256xf32, #tpu.memory_space<vmem>>, vector<4x256xf32>,
    %c0_24 = arith.constant 0 : index
    %c0_25 = arith.constant 0 : index
    %55 = vector.load %arg3[%c0_24, %c0_25] : memref<4x36xf32, #tpu.memory_space<vmem>>, vector<4x36xf32>
    %c0_26 = arith.constant 0 : index
    %c0_27 = arith.constant 0 : index
    %56 = vector.load %arg6[%c0_26, %c0_27] : memref<36x256xf32, #tpu.memory_space<vmem>>, vector<36x256xf32>
    %cst = arith.constant dense<0.000000e+00> : vector<4x256xf32>
    %57 = tpu.matmul %55, %56, %cst {dimension_numbers = #tpu.dot_dimension_numbers<[1], [0], [0], [1], [0, 0, 1, 1], [], []>} : vector<4x36xf32>, vector<36x256xf32>, vector<4x256xf32> -> vector<4x256xf32>
    %cst_28 = arith.constant dense<0.000000e+00> : vector<4xf32>
    %58 = vector.multi_reduction <add>, %57, %cst_28 [1] : vector<4x256xf32> to vector<4xf32>
    %59 = vector.shape_cast %58 : vector<4xf32> to vector<4x1xf32>
    %60 = arith.mulf %57, %57 : vector<4x256xf32>
    %cst_29 = arith.constant dense<0.000000e+00> : vector<4xf32>
    %61 = vector.multi_reduction <add>, %60, %cst_29 [1] : vector<4x256xf32> to vector<4xf32>
    %62 = vector.shape_cast %61 : vector<4xf32> to vector<4x1xf32>
    %cst_30 = arith.constant 3.906250e-03 : f32
    %63 = vector.broadcast %cst_30 : f32 to vector<4x1xf32>
    %64 = arith.mulf %59, %63 : vector<4x1xf32>
    %cst_31 = arith.constant 3.906250e-03 : f32
    %65 = vector.broadcast %cst_31 : f32 to vector<4x1xf32>
    %66 = arith.mulf %62, %65 : vector<4x1xf32>
    %67 = arith.mulf %64, %64 : vector<4x1xf32>
    %68 = arith.subf %66, %67 : vector<4x1xf32>
    %cst_32 = arith.constant 0.000000e+00 : f32
    %69 = vector.broadcast %cst_32 : f32 to vector<4x1xf32>
    %70 = arith.maximumf %68, %69 : vector<4x1xf32>
    %71 = vector.broadcast %64 : vector<4x1xf32> to vector<4x256xf32>
    %72 = arith.subf %57, %71 : vector<4x256xf32>
    %cst_33 = arith.constant 9.99999974E-6 : f32
    %73 = vector.broadcast %cst_33 : f32 to vector<4x1xf32>
    %74 = arith.addf %70, %73 : vector<4x1xf32>
    %75 = math.rsqrt %74 : vector<4x1xf32>
    %76 = vector.broadcast %75 : vector<4x1xf32> to vector<4x256xf32>
    %77 = arith.mulf %72, %76 : vector<4x256xf32>
    %cst_34 = arith.constant 0.000000e+00 : f32
    %78 = vector.broadcast %cst_34 : f32 to vector<4x256xf32>
    %79 = arith.maximumf %77, %78 : vector<4x256xf32>
    %c16_i32_35 = arith.constant 16 : i32
    %80 = tpu.dynamic_rotate %79 by %c16_i32_35 dim 1 : vector<4x256xf32>, i32 -> vector<4x256xf32>
    %c240_i32_36 = arith.constant 240 : i32
    %81 = tpu.dynamic_rotate %79 by %c240_i32_36 dim 1 : vector<4x256xf32>, i32 -> vector<4x256xf32>
    %82 = vector.shape_cast %4 : vector<1x256xi1> to vector<1x256xi1>
    %83 = vector.broadcast %82 : vector<1x256xi1> to vector<4x256xi1>
    %84 = arith.select %83, %81, %80 : vector<4x256xi1>, vector<4x256xf32>
    %85 = vector.shape_cast %7 : vector<1x256xi1> to vector<1x256xi1>
    %86 = vector.broadcast %85 : vector<1x256xi1> to vector<4x256xi1>
    %87 = arith.select %86, %80, %81 : vector<4x256xi1>, vector<4x256xf32>
    %c1_i32_37 = arith.constant 1 : i32
    %88 = tpu.dynamic_rotate %84 by %c1_i32_37 dim 1 : vector<4x256xf32>, i32 -> vector<4x256xf32>
    %c255_i32_38 = arith.constant 255 : i32
    %89 = tpu.dynamic_rotate %84 by %c255_i32_38 dim 1 : vector<4x256xf32>, i32 -> vector<4x256xf32>
    %90 = vector.shape_cast %10 : vector<1x256xi1> to vector<1x256xi1>
    %91 = vector.broadcast %90 : vector<1x256xi1> to vector<4x256xi1>
    %92 = arith.select %91, %89, %88 : vector<4x256xi1>, vector<4x256xf32>
    %93 = vector.shape_cast %13 : vector<1x256xi1> to vector<1x256xi1>
    %94 = vector.broadcast %93 : vector<1x256xi1> to vector<4x256xi1>
    %95 = arith.select %94, %88, %89 : vector<4x256xi1>, vector<4x256xf32>
    %c0_39 = arith.constant 0 : index
    %c0_40 = arith.constant 0 : index
    %96 = vector.load %arg6[%c0_39, %c0_40] : memref<36x256xf32, #tpu.memory_space<vmem>>, vector<4x256xf32>
    tpu.vector_store %arg6[%c0_39, %c0_40], %92 {strides = array<i32>} : memref<36x256xf32, #tpu.memory_space<vmem>>, vector<4x256xf32>,
    %c4_41 = arith.constant 4 : index
    %c0_42 = arith.constant 0 : index
    %97 = vector.load %arg6[%c4_41, %c0_42] : memref<36x256xf32, #tpu.memory_space<vmem>>, vector<4x256xf32>
    tpu.vector_store %arg6[%c4_41, %c0_42], %84 {strides = array<i32>} : memref<36x256xf32, #tpu.memory_space<vmem>>, vector<4x256xf32>,
    %c8_43 = arith.constant 8 : index
    %c0_44 = arith.constant 0 : index
    %98 = vector.load %arg6[%c8_43, %c0_44] : memref<36x256xf32, #tpu.memory_space<vmem>>, vector<4x256xf32>
    tpu.vector_store %arg6[%c8_43, %c0_44], %95 {strides = array<i32>} : memref<36x256xf32, #tpu.memory_space<vmem>>, vector<4x256xf32>,
    %c1_i32_45 = arith.constant 1 : i32
    %99 = tpu.dynamic_rotate %79 by %c1_i32_45 dim 1 : vector<4x256xf32>, i32 -> vector<4x256xf32>
    %c255_i32_46 = arith.constant 255 : i32
    %100 = tpu.dynamic_rotate %79 by %c255_i32_46 dim 1 : vector<4x256xf32>, i32 -> vector<4x256xf32>
    %101 = vector.shape_cast %10 : vector<1x256xi1> to vector<1x256xi1>
    %102 = vector.broadcast %101 : vector<1x256xi1> to vector<4x256xi1>
    %103 = arith.select %102, %100, %99 : vector<4x256xi1>, vector<4x256xf32>
    %104 = vector.shape_cast %13 : vector<1x256xi1> to vector<1x256xi1>
    %105 = vector.broadcast %104 : vector<1x256xi1> to vector<4x256xi1>
    %106 = arith.select %105, %99, %100 : vector<4x256xi1>, vector<4x256xf32>
    %c12_47 = arith.constant 12 : index
    %c0_48 = arith.constant 0 : index
    %107 = vector.load %arg6[%c12_47, %c0_48] : memref<36x256xf32, #tpu.memory_space<vmem>>, vector<4x256xf32>
    tpu.vector_store %arg6[%c12_47, %c0_48], %103 {strides = array<i32>} : memref<36x256xf32, #tpu.memory_space<vmem>>, vector<4x256xf32>,
    %c16_49 = arith.constant 16 : index
    %c0_50 = arith.constant 0 : index
    %108 = vector.load %arg6[%c16_49, %c0_50] : memref<36x256xf32, #tpu.memory_space<vmem>>, vector<4x256xf32>
    tpu.vector_store %arg6[%c16_49, %c0_50], %79 {strides = array<i32>} : memref<36x256xf32, #tpu.memory_space<vmem>>, vector<4x256xf32>,
    %c20_51 = arith.constant 20 : index
    %c0_52 = arith.constant 0 : index
    %109 = vector.load %arg6[%c20_51, %c0_52] : memref<36x256xf32, #tpu.memory_space<vmem>>, vector<4x256xf32>
    tpu.vector_store %arg6[%c20_51, %c0_52], %106 {strides = array<i32>} : memref<36x256xf32, #tpu.memory_space<vmem>>, vector<4x256xf32>,
    %c1_i32_53 = arith.constant 1 : i32
    %110 = tpu.dynamic_rotate %87 by %c1_i32_53 dim 1 : vector<4x256xf32>, i32 -> vector<4x256xf32>
    %c255_i32_54 = arith.constant 255 : i32
    %111 = tpu.dynamic_rotate %87 by %c255_i32_54 dim 1 : vector<4x256xf32>, i32 -> vector<4x256xf32>
    %112 = vector.shape_cast %10 : vector<1x256xi1> to vector<1x256xi1>
    %113 = vector.broadcast %112 : vector<1x256xi1> to vector<4x256xi1>
    %114 = arith.select %113, %111, %110 : vector<4x256xi1>, vector<4x256xf32>
    %115 = vector.shape_cast %13 : vector<1x256xi1> to vector<1x256xi1>
    %116 = vector.broadcast %115 : vector<1x256xi1> to vector<4x256xi1>
    %117 = arith.select %116, %110, %111 : vector<4x256xi1>, vector<4x256xf32>
    %c24_55 = arith.constant 24 : index
    %c0_56 = arith.constant 0 : index
    %118 = vector.load %arg6[%c24_55, %c0_56] : memref<36x256xf32, #tpu.memory_space<vmem>>, vector<4x256xf32>
    tpu.vector_store %arg6[%c24_55, %c0_56], %114 {strides = array<i32>} : memref<36x256xf32, #tpu.memory_space<vmem>>, vector<4x256xf32>,
    %c28_57 = arith.constant 28 : index
    %c0_58 = arith.constant 0 : index
    %119 = vector.load %arg6[%c28_57, %c0_58] : memref<36x256xf32, #tpu.memory_space<vmem>>, vector<4x256xf32>
    tpu.vector_store %arg6[%c28_57, %c0_58], %87 {strides = array<i32>} : memref<36x256xf32, #tpu.memory_space<vmem>>, vector<4x256xf32>,
    %c32_59 = arith.constant 32 : index
    %c0_60 = arith.constant 0 : index
    %120 = vector.load %arg6[%c32_59, %c0_60] : memref<36x256xf32, #tpu.memory_space<vmem>>, vector<4x256xf32>
    tpu.vector_store %arg6[%c32_59, %c0_60], %117 {strides = array<i32>} : memref<36x256xf32, #tpu.memory_space<vmem>>, vector<4x256xf32>,
    %c0_61 = arith.constant 0 : index
    %c0_62 = arith.constant 0 : index
    %121 = vector.load %arg4[%c0_61, %c0_62] : memref<4x36xf32, #tpu.memory_space<vmem>>, vector<4x36xf32>
    %c0_63 = arith.constant 0 : index
    %c0_64 = arith.constant 0 : index
    %122 = vector.load %arg6[%c0_63, %c0_64] : memref<36x256xf32, #tpu.memory_space<vmem>>, vector<36x256xf32>
    %cst_65 = arith.constant dense<0.000000e+00> : vector<4x256xf32>
    %123 = tpu.matmul %121, %122, %cst_65 {dimension_numbers = #tpu.dot_dimension_numbers<[1], [0], [0], [1], [0, 0, 1, 1], [], []>} : vector<4x36xf32>, vector<36x256xf32>, vector<4x256xf32> -> vector<4x256xf32>
    %cst_66 = arith.constant dense<0.000000e+00> : vector<4xf32>
    %124 = vector.multi_reduction <add>, %123, %cst_66 [1] : vector<4x256xf32> to vector<4xf32>
    %125 = vector.shape_cast %124 : vector<4xf32> to vector<4x1xf32>
    %126 = arith.mulf %123, %123 : vector<4x256xf32>
    %cst_67 = arith.constant dense<0.000000e+00> : vector<4xf32>
    %127 = vector.multi_reduction <add>, %126, %cst_67 [1] : vector<4x256xf32> to vector<4xf32>
    %128 = vector.shape_cast %127 : vector<4xf32> to vector<4x1xf32>
    %cst_68 = arith.constant 3.906250e-03 : f32
    %129 = vector.broadcast %cst_68 : f32 to vector<4x1xf32>
    %130 = arith.mulf %125, %129 : vector<4x1xf32>
    %cst_69 = arith.constant 3.906250e-03 : f32
    %131 = vector.broadcast %cst_69 : f32 to vector<4x1xf32>
    %132 = arith.mulf %128, %131 : vector<4x1xf32>
    %133 = arith.mulf %130, %130 : vector<4x1xf32>
    %134 = arith.subf %132, %133 : vector<4x1xf32>
    %cst_70 = arith.constant 0.000000e+00 : f32
    %135 = vector.broadcast %cst_70 : f32 to vector<4x1xf32>
    %136 = arith.maximumf %134, %135 : vector<4x1xf32>
    %137 = vector.broadcast %130 : vector<4x1xf32> to vector<4x256xf32>
    %138 = arith.subf %123, %137 : vector<4x256xf32>
    %cst_71 = arith.constant 9.99999974E-6 : f32
    %139 = vector.broadcast %cst_71 : f32 to vector<4x1xf32>
    %140 = arith.addf %136, %139 : vector<4x1xf32>
    %141 = math.rsqrt %140 : vector<4x1xf32>
    %142 = vector.broadcast %141 : vector<4x1xf32> to vector<4x256xf32>
    %143 = arith.mulf %138, %142 : vector<4x256xf32>
    %144 = arith.addf %1, %143 : vector<4x256xf32>
    %c0_72 = arith.constant 0 : index
    %c0_73 = arith.constant 0 : index
    %c0_74 = arith.constant 0 : index
    %145 = vector.load %arg5[%c0_72, %c0_73, %c0_74] : memref<1x4x256xf32, #tpu.memory_space<vmem>>, vector<1x4x256xf32>
    %146 = vector.shape_cast %145 : vector<1x4x256xf32> to vector<4x256xf32>
    %147 = vector.shape_cast %144 : vector<4x256xf32> to vector<1x4x256xf32>
    tpu.vector_store %arg5[%c0_72, %c0_73, %c0_74], %147 {strides = array<i32>} : memref<1x4x256xf32, #tpu.memory_space<vmem>>, vector<1x4x256xf32>,
    return
  }
  func.func @transform_0(%arg0: i32) -> (i32, i32) {
    %c0_i32 = arith.constant 0 : i32
    %c0_i32_0 = arith.constant 0 : i32
    %c0_i32_1 = arith.constant 0 : i32
    return %c0_i32, %c0_i32_0 : i32, i32
  }
  func.func @transform_1(%arg0: i32) -> (i32, i32, i32) {
    %c0_i32 = arith.constant 0 : i32
    %c0_i32_0 = arith.constant 0 : i32
    %c0_i32_1 = arith.constant 0 : i32
    return %arg0, %c0_i32, %c0_i32_0 : i32, i32, i32
  }
  func.func @transform_2(%arg0: i32) -> (i32, i32) {
    %c0_i32 = arith.constant 0 : i32
    %c0_i32_0 = arith.constant 0 : i32
    %c0_i32_1 = arith.constant 0 : i32
    return %c0_i32, %c0_i32_0 : i32, i32
  }
  func.func @transform_3(%arg0: i32) -> (i32, i32) {
    %c0_i32 = arith.constant 0 : i32
    %c0_i32_0 = arith.constant 0 : i32
    %c0_i32_1 = arith.constant 0 : i32
    return %c0_i32, %c0_i32_0 : i32, i32
  }
  func.func @transform_4(%arg0: i32) -> (i32, i32, i32) {
    %c0_i32 = arith.constant 0 : i32
    %c0_i32_0 = arith.constant 0 : i32
    %c0_i32_1 = arith.constant 0 : i32
    return %arg0, %c0_i32, %c0_i32_0 : i32, i32, i32
  }
}

</mosaic_0001>

<llo_original>
// kernel: tpu_custom_call.1
$region0: #{tpu_custom_call.1}
  #allocation0 [shape = 'u32[]', space=smem, size = 0x4, offset = 0x4, fixed_abs, tag = 'smem constant byte address 0x4 - core index']
  #allocation1 [shape = 'u32[72,128]{1,0:T(1,128)}', space=vmem, size = 0x9000, scoped, tag = 'internal scratch']
  #allocation2 [shape = 'f32[36,256]{1,0:T(8,128)}', space=vmem, size = 0xa000, scoped, tag = 'scratch operand']
  %s0 = inlined_call_operand.hbm [shape: s32[4,256], index: 0, kind: input, shape index: {}]
  %s1 = inlined_call_operand.hbm [shape: f32[2,4,256], index: 1, kind: input, shape index: {}]
  %s2 = inlined_call_operand.hbm [shape: f32[4,36], index: 2, kind: input, shape index: {}]
  %s3 = inlined_call_operand.hbm [shape: f32[4,36], index: 3, kind: input, shape index: {}]
  %s4 = inlined_call_operand.hbm [shape: f32[2,4,256], index: 4, kind: output, shape index: {}]
  %s5 = sld [smem:[#allocation0]]
  $region65: #{tpu_custom_call.1} parent=0
    _
  %s7 = ssub.s32 1, %s5
  %s8 = scalar_select 0, %s7, %s5
  $region1: #{tpu_custom_call.1} parent=0
    #allocation3 [shape = 'u8[4096]{0}', space=vmem, size = 0x1000, scoped, tag = 'input window, operand 0, single buffered']
    #allocation4 [shape = 's32[2]{0}', space=sflag, size = 0x8, scoped, tag = 'scoped memory for tpu_custom_call.1']
    #allocation5 [shape = 's32[2]{0}', space=sflag, size = 0x8, scoped, tag = 'scoped memory for tpu_custom_call.1']
    #allocation6 [shape = 'u8[8192]{0}', space=vmem, size = 0x2000, scoped, tag = 'input window, operand 1']
    #allocation7 [shape = 's32[2]{0}', space=sflag, size = 0x8, scoped, tag = 'scoped memory for tpu_custom_call.1']
    #allocation8 [shape = 'u8[2048]{0}', space=vmem, size = 0x800, scoped, tag = 'input window, operand 2, single buffered']
    #allocation9 [shape = 'u8[2048]{0}', space=vmem, size = 0x800, scoped, tag = 'input window, operand 3, single buffered']
    #allocation10 [shape = 's32[1]{0}', space=sflag, size = 0x4, scoped, tag = 'scoped memory for tpu_custom_call.1']
    #allocation11 [shape = 'u8[8192]{0}', space=vmem, size = 0x2000, scoped, tag = 'output window, operand 0']
    %9 = vsyncpa [#allocation4], 0
    %10 = vsyncpa [#allocation7], 0
    %s11 = scalar_lea.sflag [#allocation7], 1
    %12 = vsyncpa %s11, 0
    %13 = vsyncpa [#allocation10], 0
    %14 = vsyncpa [#allocation5], 0
    %s15 = scalar_lea.sflag [#allocation5], 1
    %16 = vsyncpa %s15, 0
    loop: start=0, step=1, limit=4
    $region2: #{tpu_custom_call.1} parent=1 // loop_pre_header
      _
    $region3: #{tpu_custom_call.1} parent=1 // loop_header
      %s18 = sphi 0, %s22
      %p19 = scmp.ge.s32.totalorder %s18, 4
      %s26 = sphi 0, %s26
      %s28 = sphi 0, %s26
      %s29 = sphi 0, %s28
      %s43 = sphi 0, %s29
      %s49 = sphi 0, %s51
      %s52 = sphi 0, %s49
      %s53 = sphi 0, %s52
      %s69 = sphi 0, %s53
      %s73 = sphi 0, %s73
      %s75 = sphi 0, %s73
      %s76 = sphi 0, %s75
      %s90 = sphi 0, %s76
      %s94 = sphi 0, %s94
      %s96 = sphi 0, %s94
      %s97 = sphi 0, %s96
      %s111 = sphi 0, %s97
      %s117 = sphi 0, %s119
      %s120 = sphi 0, %s117
      %s121 = sphi 0, %s120
      %s137 = sphi 0, %s121
    $region4: #{tpu_custom_call.1} parent=1 // loop_header_branch
      %21 = sbr.rel (%p19) target = $region8
    $region5: #{tpu_custom_call.1} parent=1 // loop_body
      %s23 = ssub.s32 %s18, 1
      %s24 = ssub.s32 %s18, 2
      %s25 = sadd.s32 %s18, 1
      %s27 = sadd.s32 %s26, 1
      %p30 = scmp.eq.s32.totalorder %s18, 1
      %p31 = scmp.ne.s32.totalorder %s26, %s28
      %p32 = scmp.eq.s32.totalorder %s18, 0
      %p33 = por %p31, %p32
      %p34 = scmp.ne.s32.totalorder %s26, %s28
      %p35 = scmp.eq.s32.totalorder %s23, 1
      %p36 = por %p34, %p35
      %p37 = scmp.ne.s32.totalorder %s28, %s29
      %p38 = scmp.eq.s32.totalorder %s23, 0
      %p39 = por %p37, %p38
      %p40 = scmp.ne.s32.totalorder %s28, %s29
      %p41 = scmp.eq.s32.totalorder %s24, 1
      %p42 = por %p40, %p41
      %p44 = scmp.ne.s32.totalorder %s29, %s43
      %p45 = scmp.eq.s32.totalorder %s24, 0
      %p46 = por %p44, %p45
      %s47 = ssub.s32 %s18, %s25
      %p48 = scmp.eq.s32.totalorder %s47, 0
      %s50 = sadd.s32 %s49, 1
      %s51 = scalar_select %p48, %s49, %s50
      %p54 = pneg %p48
      %p55 = scmp.eq.s32.totalorder %s18, 1
      %p56 = por %p54, %p55
      %p57 = scmp.ne.s32.totalorder %s49, %s52
      %p58 = scmp.eq.s32.totalorder %s18, 0
      %p59 = por %p57, %p58
      %p60 = scmp.ne.s32.totalorder %s49, %s52
      %p61 = scmp.eq.s32.totalorder %s23, 1
      %p62 = por %p60, %p61
      %p63 = scmp.ne.s32.totalorder %s52, %s53
      %p64 = scmp.eq.s32.totalorder %s23, 0
      %p65 = por %p63, %p64
      %p66 = scmp.ne.s32.totalorder %s52, %s53
      %p67 = scmp.eq.s32.totalorder %s24, 1
      %p68 = por %p66, %p67
      %p70 = scmp.ne.s32.totalorder %s53, %s69
      %p71 = scmp.eq.s32.totalorder %s24, 0
      %p72 = por %p70, %p71
      %s74 = sadd.s32 %s73, 1
      %p77 = scmp.eq.s32.totalorder %s18, 1
      %p78 = scmp.ne.s32.totalorder %s73, %s75
      %p79 = scmp.eq.s32.totalorder %s18, 0
      %p80 = por %p78, %p79
      %p81 = scmp.ne.s32.totalorder %s73, %s75
      %p82 = scmp.eq.s32.totalorder %s23, 1
      %p83 = por %p81, %p82
      %p84 = scmp.ne.s32.totalorder %s75, %s76
      %p85 = scmp.eq.s32.totalorder %s23, 0
      %p86 = por %p84, %p85
      %p87 = scmp.ne.s32.totalorder %s75, %s76
      %p88 = scmp.eq.s32.totalorder %s24, 1
      %p89 = por %p87, %p88
      %p91 = scmp.ne.s32.totalorder %s76, %s90
      %p92 = scmp.eq.s32.totalorder %s24, 0
      %p93 = por %p91, %p92
      %s95 = sadd.s32 %s94, 1
      %p98 = scmp.eq.s32.totalorder %s18, 1
      %p99 = scmp.ne.s32.totalorder %s94, %s96
      %p100 = scmp.eq.s32.totalorder %s18, 0
      %p101 = por %p99, %p100
      %p102 = scmp.ne.s32.totalorder %s94, %s96
      %p103 = scmp.eq.s32.totalorder %s23, 1
      %p104 = por %p102, %p103
      %p105 = scmp.ne.s32.totalorder %s96, %s97
      %p106 = scmp.eq.s32.totalorder %s23, 0
      %p107 = por %p105, %p106
      %p108 = scmp.ne.s32.totalorder %s96, %s97
      %p109 = scmp.eq.s32.totalorder %s24, 1
      %p110 = por %p108, %p109
      %p112 = scmp.ne.s32.totalorder %s97, %s111
      %p113 = scmp.eq.s32.totalorder %s24, 0
      %p114 = por %p112, %p113
      %s115 = ssub.s32 %s18, %s25
      %p116 = scmp.eq.s32.totalorder %s115, 0
      %s118 = sadd.s32 %s117, 1
      %s119 = scalar_select %p116, %s117, %s118
      %p122 = pneg %p116
      %p123 = scmp.eq.s32.totalorder %s18, 1
      %p124 = por %p122, %p123
      %p125 = scmp.ne.s32.totalorder %s117, %s120
      %p126 = scmp.eq.s32.totalorder %s18, 0
      %p127 = por %p125, %p126
      %p128 = scmp.ne.s32.totalorder %s117, %s120
      %p129 = scmp.eq.s32.totalorder %s23, 1
      %p130 = por %p128, %p129
      %p131 = scmp.ne.s32.totalorder %s120, %s121
      %p132 = scmp.eq.s32.totalorder %s23, 0
      %p133 = por %p131, %p132
      %p134 = scmp.ne.s32.totalorder %s120, %s121
      %p135 = scmp.eq.s32.totalorder %s24, 1
      %p136 = por %p134, %p135
      %p138 = scmp.ne.s32.totalorder %s121, %s137
      %p139 = scmp.eq.s32.totalorder %s24, 0
      %p140 = por %p138, %p139
      %p141 = scmp.le.s32.totalorder 1, %s18
      %p142 = scmp.lt.s32.totalorder %s18, 3
      %p143 = pnand %p141, %p142
      %p144 = pneg %p143
      // Predicated region
      $region9: #{tpu_custom_call.1} parent=5 // pred_check
        _
      $region10: #{tpu_custom_call.1} parent=5 // pred_check_branch
        %146 = sbr.rel (%p143) target = $region12
      $region11: #{tpu_custom_call.1} parent=5 // pred_region
        %s147 = ssub.s32 %s18, 1
        // Predicated region
        $region13: #{tpu_custom_call.1} parent=11 // pred_check
          %p148 = pneg %p39
        $region14: #{tpu_custom_call.1} parent=11 // pred_check_branch
          %150 = sbr.rel (%p148) target = $region16
        $region15: #{tpu_custom_call.1} parent=11 // pred_region
          %152 = vsyncadd [#allocation4], 0
          %s154 = sshll.u32 %s0, 4
          %s155 = int_to_ptr.hbm [resolvable:$true] %s154
          %s156 = sshll.u32 [#allocation3], 4
          %s157 = int_to_ptr.vmem [resolvable:$true] %s156
          %159 = dma.hbm_to_vmem [thread:$0]  %s155, 128, %s157, [#allocation4]
        $region16: #{tpu_custom_call.1} parent=11 // pred_fallthru
          _
        // Predicated region
        $region17: #{tpu_custom_call.1} parent=11 // pred_check
          %p160 = pneg %p86
        $region18: #{tpu_custom_call.1} parent=11 // pred_check_branch
          %162 = sbr.rel (%p160) target = $region20
        $region19: #{tpu_custom_call.1} parent=11 // pred_region
          %164 = vsyncadd [#allocation7], 0
          %s166 = sshll.u32 %s2, 4
          %s167 = int_to_ptr.hbm [resolvable:$true] %s166
          %s168 = sshll.u32 [#allocation8], 4
          %s169 = int_to_ptr.vmem [resolvable:$true] %s168
          %171 = dma.hbm_to_vmem [thread:$0]  %s167, 64, %s169, [#allocation7]
        $region20: #{tpu_custom_call.1} parent=11 // pred_fallthru
          _
        // Predicated region
        $region21: #{tpu_custom_call.1} parent=11 // pred_check
          %p172 = pneg %p107
        $region22: #{tpu_custom_call.1} parent=11 // pred_check_branch
          %174 = sbr.rel (%p172) target = $region24
        $region23: #{tpu_custom_call.1} parent=11 // pred_region
          %176 = vsyncadd [#allocation10], 0
          %s178 = sshll.u32 %s3, 4
          %s179 = int_to_ptr.hbm [resolvable:$true] %s178
          %s180 = sshll.u32 [#allocation9], 4
          %s181 = int_to_ptr.vmem [resolvable:$true] %s180
          %183 = dma.hbm_to_vmem [thread:$0]  %s179, 64, %s181, [#allocation10]
        $region24: #{tpu_custom_call.1} parent=11 // pred_fallthru
          _
      $region12: #{tpu_custom_call.1} parent=5 // pred_fallthru
        _
      %p184 = scmp.lt.s32.totalorder %s18, 2
      // Predicated region
      $region25: #{tpu_custom_call.1} parent=5 // pred_check
        %p185 = pneg %p184
      $region26: #{tpu_custom_call.1} parent=5 // pred_check_branch
        %187 = sbr.rel (%p185) target = $region28
      $region27: #{tpu_custom_call.1} parent=5 // pred_region
        // Predicated region
        $region29: #{tpu_custom_call.1} parent=27 // pred_check
          %p188 = pneg %p59
        $region30: #{tpu_custom_call.1} parent=27 // pred_check_branch
          %190 = sbr.rel (%p188) target = $region32
        $region31: #{tpu_custom_call.1} parent=27 // pred_region
          %s191 = sand.u32 %s18, 1
          %s192 = scalar_lea.sflag [#allocation7], %s191
          %s193 = sand.u32 %s49, 1
          %s194 = smul.addr %s193, 8
          %s195 = scalar_lea.vmem [#allocation6], %s194
          %197 = vsyncadd %s192, 0
          %s198 = smul.addr %s18, 2
          %s199 = smul.addr %s198, 4
          %s200 = scalar_lea.hbm %s1, %s199
          %s202 = sshll.u32 %s200, 4
          %s203 = int_to_ptr.hbm [resolvable:$true] %s202
          %s204 = sshll.u32 %s195, 4
          %s205 = int_to_ptr.vmem [resolvable:$true] %s204
          %207 = dma.hbm_to_vmem [thread:$0]  %s203, 128, %s205, %s192
        $region32: #{tpu_custom_call.1} parent=27 // pred_fallthru
          _
      $region28: #{tpu_custom_call.1} parent=5 // pred_fallthru
        _
      %p208 = scmp.le.s32.totalorder 1, %s18
      %p209 = scmp.lt.s32.totalorder %s18, 3
      %p210 = pnand %p208, %p209
      %p211 = pneg %p210
      // Predicated region
      $region33: #{tpu_custom_call.1} parent=5 // pred_check
        _
      $region34: #{tpu_custom_call.1} parent=5 // pred_check_branch
        %213 = sbr.rel (%p210) target = $region36
      $region35: #{tpu_custom_call.1} parent=5 // pred_region
        %s214 = ssub.s32 %s18, 1
        // Predicated region
        $region37: #{tpu_custom_call.1} parent=35 // pred_check
          %p215 = pneg %p39
        $region38: #{tpu_custom_call.1} parent=35 // pred_check_branch
          %217 = sbr.rel (%p215) target = $region40
        $region39: #{tpu_custom_call.1} parent=35 // pred_region
          %219 = dma.done [#allocation4], 128
        $region40: #{tpu_custom_call.1} parent=35 // pred_fallthru
          _
        %s220 = sand.u32 %s23, 1
        %s221 = scalar_lea.sflag [#allocation7], %s220
        %s222 = sand.u32 %s52, 1
        %s223 = smul.addr %s222, 8
        %s224 = scalar_lea.vmem [#allocation6], %s223
        // Predicated region
        $region41: #{tpu_custom_call.1} parent=35 // pred_check
          %p225 = pneg %p65
        $region42: #{tpu_custom_call.1} parent=35 // pred_check_branch
          %227 = sbr.rel (%p225) target = $region44
        $region43: #{tpu_custom_call.1} parent=35 // pred_region
          %229 = dma.done %s221, 128
        $region44: #{tpu_custom_call.1} parent=35 // pred_fallthru
          _
        // Predicated region
        $region45: #{tpu_custom_call.1} parent=35 // pred_check
          %p230 = pneg %p86
        $region46: #{tpu_custom_call.1} parent=35 // pred_check_branch
          %232 = sbr.rel (%p230) target = $region48
        $region47: #{tpu_custom_call.1} parent=35 // pred_region
          %234 = dma.done [#allocation7], 64
        $region48: #{tpu_custom_call.1} parent=35 // pred_fallthru
          _
        // Predicated region
        $region49: #{tpu_custom_call.1} parent=35 // pred_check
          %p235 = pneg %p107
        $region50: #{tpu_custom_call.1} parent=35 // pred_check_branch
          %237 = sbr.rel (%p235) target = $region52
        $region51: #{tpu_custom_call.1} parent=35 // pred_region
          %239 = dma.done [#allocation10], 64
        $region52: #{tpu_custom_call.1} parent=35 // pred_fallthru
          _
        %p240 = pneg %p39
        %p241 = pneg %p36
        %s242 = sand.u32 %s23, 1
        %s243 = scalar_lea.sflag [#allocation7], %s242
        %s244 = sand.u32 %s52, 1
        %s245 = smul.addr %s244, 8
        %s246 = scalar_lea.vmem [#allocation6], %s245
        %p247 = pneg %p65
        %p248 = pneg %p62
        %p249 = pneg %p86
        %p250 = pneg %p83
        %p251 = pneg %p107
        %p252 = pneg %p104
        %p253 = pneg %p133
        %p254 = pneg %p130
        %s255 = sand.u32 %s120, 1
        %s256 = scalar_lea.sflag [#allocation5], %s255
        %s257 = sand.u32 %s120, 1
        %s258 = smul.addr %s257, 8
        %s259 = scalar_lea.vmem [#allocation11], %s258
        %v260 = vld [vmem:[%s224] sm:$0xff]
        %v261 = vld [vmem:[#allocation3] ss:$4 sm:$0x3]
        %vm262 = vcmp.ne.s32.totalorder %v261, 0
        %s263 = scalar_lea.vmem [#allocation3], 1
        %v264 = vld [vmem:[%s263] ss:$4 sm:$0x3]
        %vm265 = vcmp.ne.s32.totalorder %v264, 0
        %s266 = scalar_lea.vmem [#allocation3], 2
        %v267 = vld [vmem:[%s266] ss:$4 sm:$0x3]
        %vm268 = vcmp.ne.s32.totalorder %v267, 0
        %s269 = scalar_lea.vmem [#allocation3], 3
        %v270 = vld [vmem:[%s269] ss:$4 sm:$0x3]
        %vm271 = vcmp.ne.s32.totalorder %v270, 0
        %273 = vst [vmem:[#allocation1] ss:$2 sm:$0xff] %v260
        %v274 = vld.sshfl [vmem:[#allocation1] sm:$0xff pattern:$0x75316420]
        %v275 = vld.sshfl [vmem:[#allocation1 + $0x8] sm:$0xff pattern:$0x75316420]
        %278 = vrot.lane.b32.xlu0 %v274, 16
        %v279 = vpop.permute.xlu0 %278
        %280 = vrot.lane.b32.xlu0 %v275, 16
        %v281 = vpop.permute.xlu0 %280
        %v282 = vlaneseq
        %v283 = vand.u32 %v282, 127
        %vm284 = vcmp.lt.s32.totalorder %v283, 16
        %v285 = vsel %vm284, %v279, %v281
        %v286 = vsel %vm284, %v281, %v279
        %287 = vst [vmem:[#allocation1] ss:$2 sm:$0xff] %v260
        %v288 = vld.sshfl [vmem:[#allocation1] sm:$0xff pattern:$0x75316420]
        %v289 = vld.sshfl [vmem:[#allocation1 + $0x8] sm:$0xff pattern:$0x75316420]
        %292 = vrot.lane.b32.xlu0 %v288, 112
        %v293 = vpop.permute.xlu0 %292
        %294 = vrot.lane.b32.xlu0 %v289, 112
        %v295 = vpop.permute.xlu0 %294
        %vm296 = vcmp.lt.s32.totalorder %v283, 112
        %v297 = vsel %vm296, %v293, %v295
        %v298 = vsel %vm296, %v295, %v293
        %v299 = vsel %vm262, 1, 0
        %v300 = vperm.slane %v299, 0
        %v301 = vperm.slane %v299, 1
        %vm302 = vcmp.eq.s32.totalorder %v300, 1
        %vm303 = vcmp.eq.s32.totalorder %v301, 1
        %v304 = vsel %vm302, %v297, %v286
        %v305 = vsel %vm303, %v298, %v285
        %v306 = vsel %vm265, 1, 0
        %v307 = vperm.slane %v306, 0
        %v308 = vperm.slane %v306, 1
        %vm309 = vcmp.eq.s32.totalorder %v307, 1
        %vm310 = vcmp.eq.s32.totalorder %v308, 1
        %v311 = vsel %vm309, %v286, %v297
        %v312 = vsel %vm310, %v285, %v298
        %313 = vrot.lane.b32.xlu0 %v304, 1
        %v314 = vpop.permute.xlu0 %313
        %315 = vrot.lane.b32.xlu0 %v305, 1
        %v316 = vpop.permute.xlu0 %315
        %vm317 = vcmp.lt.s32.totalorder %v283, 1
        %v318 = vsel %vm317, %v314, %v316
        %v319 = vsel %vm317, %v316, %v314
        %320 = vrot.lane.b32.xlu0 %v304, 127
        %v321 = vpop.permute.xlu0 %320
        %322 = vrot.lane.b32.xlu0 %v305, 127
        %v323 = vpop.permute.xlu0 %322
        %vm324 = vcmp.lt.s32.totalorder %v283, 127
        %v325 = vsel %vm324, %v321, %v323
        %v326 = vsel %vm324, %v323, %v321
        %v327 = vsel %vm268, 1, 0
        %v328 = vperm.slane %v327, 0
        %v329 = vperm.slane %v327, 1
        %vm330 = vcmp.eq.s32.totalorder %v328, 1
        %vm331 = vcmp.eq.s32.totalorder %v329, 1
        %v332 = vsel %vm330, %v325, %v319
        %v333 = vsel %vm331, %v326, %v318
        %v334 = vsel %vm271, 1, 0
        %v335 = vperm.slane %v334, 0
        %v336 = vperm.slane %v334, 1
        %vm337 = vcmp.eq.s32.totalorder %v335, 1
        %vm338 = vcmp.eq.s32.totalorder %v336, 1
        %v339 = vsel %vm337, %v319, %v325
        %v340 = vsel %vm338, %v318, %v326
        %341 = vst [vmem:[#allocation2] sm:$0xf] %v332
        %342 = vst [vmem:[#allocation2 + $0x8] sm:$0xf] %v333
        %v345 = vrot.slane %v304, 4
        %v346 = vrot.slane %v305, 4
        %349 = vst [vmem:[#allocation2] sm:$0xf0] %v345
        %350 = vst [vmem:[#allocation2 + $0x8] sm:$0xf0] %v346
        %351 = vst [vmem:[#allocation2 + $0x10] sm:$0xf] %v339
        %352 = vst [vmem:[#allocation2 + $0x18] sm:$0xf] %v340
        %353 = vst [vmem:[#allocation1] ss:$2 sm:$0xff] %v260
        %v354 = vld.sshfl [vmem:[#allocation1] sm:$0xff pattern:$0x75316420]
        %v355 = vld.sshfl [vmem:[#allocation1 + $0x8] sm:$0xff pattern:$0x75316420]
        %358 = vrot.lane.b32.xlu0 %v354, 1
        %v359 = vpop.permute.xlu0 %358
        %360 = vrot.lane.b32.xlu0 %v355, 1
        %v361 = vpop.permute.xlu0 %360
        %v362 = vsel %vm317, %v359, %v361
        %v363 = vsel %vm317, %v361, %v359
        %364 = vst [vmem:[#allocation1] ss:$2 sm:$0xff] %v260
        %v365 = vld.sshfl [vmem:[#allocation1] sm:$0xff pattern:$0x75316420]
        %v366 = vld.sshfl [vmem:[#allocation1 + $0x8] sm:$0xff pattern:$0x75316420]
        %369 = vrot.lane.b32.xlu0 %v365, 127
        %v370 = vpop.permute.xlu0 %369
        %371 = vrot.lane.b32.xlu0 %v366, 127
        %v372 = vpop.permute.xlu0 %371
        %v373 = vsel %vm324, %v370, %v372
        %v374 = vsel %vm324, %v372, %v370
        %v375 = vsel %vm330, %v373, %v363
        %v376 = vsel %vm331, %v374, %v362
        %v377 = vsel %vm337, %v363, %v373
        %v378 = vsel %vm338, %v362, %v374
        %v381 = vrot.slane %v375, 4
        %v382 = vrot.slane %v376, 4
        %385 = vst [vmem:[#allocation2 + $0x10] sm:$0xf0] %v381
        %386 = vst [vmem:[#allocation2 + $0x18] sm:$0xf0] %v382
        %387 = vst [vmem:[#allocation1] ss:$2 sm:$0xff] %v260
        %v388 = vld.sshfl [vmem:[#allocation1] sm:$0xff pattern:$0x75316420]
        %v389 = vld.sshfl [vmem:[#allocation1 + $0x8] sm:$0xff pattern:$0x75316420]
        %392 = vst [vmem:[#allocation2 + $0x20] sm:$0xf] %v388
        %393 = vst [vmem:[#allocation2 + $0x28] sm:$0xf] %v389
        %v396 = vrot.slane %v377, 4
        %v397 = vrot.slane %v378, 4
        %400 = vst [vmem:[#allocation2 + $0x20] sm:$0xf0] %v396
        %401 = vst [vmem:[#allocation2 + $0x28] sm:$0xf0] %v397
        %402 = vrot.lane.b32.xlu0 %v311, 1
        %v403 = vpop.permute.xlu0 %402
        %404 = vrot.lane.b32.xlu0 %v312, 1
        %v405 = vpop.permute.xlu0 %404
        %v406 = vsel %vm317, %v403, %v405
        %v407 = vsel %vm317, %v405, %v403
        %408 = vrot.lane.b32.xlu0 %v311, 127
        %v409 = vpop.permute.xlu0 %408
        %410 = vrot.lane.b32.xlu0 %v312, 127
        %v411 = vpop.permute.xlu0 %410
        %v412 = vsel %vm324, %v409, %v411
        %v413 = vsel %vm324, %v411, %v409
        %v414 = vsel %vm330, %v412, %v407
        %v415 = vsel %vm331, %v413, %v406
        %v416 = vsel %vm337, %v407, %v412
        %v417 = vsel %vm338, %v406, %v413
        %418 = vst [vmem:[#allocation2 + $0x30] sm:$0xf] %v414
        %419 = vst [vmem:[#allocation2 + $0x38] sm:$0xf] %v415
        %v422 = vrot.slane %v311, 4
        %v423 = vrot.slane %v312, 4
        %426 = vst [vmem:[#allocation2 + $0x30] sm:$0xf0] %v422
        %427 = vst [vmem:[#allocation2 + $0x38] sm:$0xf0] %v423
        %428 = vst [vmem:[#allocation2 + $0x40] sm:$0xf] %v416
        %429 = vst [vmem:[#allocation2 + $0x48] sm:$0xf] %v417
        %v430 = vld [vmem:[#allocation8] sm:$0xf]
        %v431 = vld [vmem:[#allocation2] sm:$0xff]
        %v432 = vld [vmem:[#allocation2 + $0x8] sm:$0xff]
        %v433 = vld [vmem:[#allocation2 + $0x10] sm:$0xff]
        %v434 = vld [vmem:[#allocation2 + $0x18] sm:$0xff]
        %v435 = vld [vmem:[#allocation2 + $0x20] sm:$0xff]
        %v436 = vld [vmem:[#allocation2 + $0x28] sm:$0xff]
        %v437 = vld [vmem:[#allocation2 + $0x30] sm:$0xff]
        %v438 = vld [vmem:[#allocation2 + $0x38] sm:$0xff]
        %v439 = vld [vmem:[#allocation2 + $0x40] sm:$0xf]
        %v440 = vld [vmem:[#allocation2 + $0x48] sm:$0xf]
        %vm441 = vcmask 293888
        %v443 = vsel %vm441, %v430, 0
        %vm445 = vcmask 1043456
        %v447 = vsel %vm445, %v439, 0
        %v450 = vsel %vm445, %v440, 0
        %452 = vmatpush.msra.mxu0 0.0
        %453 = vmatpush.msra.mxu0 0.0
        %454 = vmatpush.msra.mxu0 0.0
        %455 = vmatpush.msra.mxu0 0.0
        %456 = vmatpush.msra.mxu0 0.0
        %457 = vmatpush.msra.mxu0 0.0
        %458 = vmatpush.msra.mxu0 0.0
        %459 = vmatpush.msra.mxu0 0.0
        %460 = vmatpush.msra.mxu0 0.0
        %461 = vmatpush.msra.mxu0 0.0
        %462 = vmatpush.msra.mxu0 0.0
        %463 = vmatpush.msra.mxu0 %v447
        %464 = vmatpush.msra.mxu0 %v437
        %465 = vmatpush.msra.mxu0 %v435
        %466 = vmatpush.msra.mxu0 %v433
        %467 = vmatpush.msra.mxu0 %v431
        %468 = vmatmul.f32.gmra.mxu0 %v443
        %v469 = vpop.f32.mrf.mxu0
        %v470 = vadd.f32 0.0, %v469
        %471 = vdwg.mxu0
        %472 = vmatpush.msra.mxu0 0.0
        %473 = vmatpush.msra.mxu0 0.0
        %474 = vmatpush.msra.mxu0 0.0
        %475 = vmatpush.msra.mxu0 0.0
        %476 = vmatpush.msra.mxu0 0.0
        %477 = vmatpush.msra.mxu0 0.0
        %478 = vmatpush.msra.mxu0 0.0
        %479 = vmatpush.msra.mxu0 0.0
        %480 = vmatpush.msra.mxu0 0.0
        %481 = vmatpush.msra.mxu0 0.0
        %482 = vmatpush.msra.mxu0 0.0
        %483 = vmatpush.msra.mxu0 %v450
        %484 = vmatpush.msra.mxu0 %v438
        %485 = vmatpush.msra.mxu0 %v436
        %486 = vmatpush.msra.mxu0 %v434
        %487 = vmatpush.msra.mxu0 %v432
        %488 = vmatmul.f32.gmra.mxu0 %v443
        %v489 = vpop.f32.mrf.mxu0
        %v490 = vadd.f32 0.0, %v489
        %491 = vdwg.mxu0
        %v492 = vsel %vm445, %v470, 0.0
        %v493 = vsel %vm445, %v490, 0.0
        %v494 = vadd.f32 %v492, %v493
        %495 = vadd.xlane.f32.xlu0 %v494
        %v496 = vpop.xlane.xlu0 %495
        %v497 = vmul.f32 %v470, %v470
        %v498 = vmul.f32 %v490, %v490
        %v499 = vsel %vm445, %v497, 0.0
        %v500 = vsel %vm445, %v498, 0.0
        %v501 = vadd.f32 %v499, %v500
        %502 = vadd.xlane.f32.xlu0 %v501
        %v503 = vpop.xlane.xlu0 %502
        %v504 = vmul.f32 %v496, 0.00390625
        %v505 = vmul.f32 %v503, 0.00390625
        %v506 = vmul.f32 %v504, %v504
        %v507 = vsub.f32 %v505, %v506
        %v508 = vmax.f32 %v507, 0.0
        %v509 = vsub.f32 %v470, %v504
        %v510 = vsub.f32 %v490, %v504
        %v511 = vadd.f32 %v508, 1e-05
        %v512 = vrsqrt.pop %v511
        %v513 = vmul.f32 %v512, %v511
        %v514 = vmul.f32 %v513, %v512
        %v515 = vmul.f32 0.5, %v514
        %v516 = vsub.f32 1.5, %v515
        %v517 = vmul.f32 %v512, %v516
        %vm518 = vweird.f32 %v511
        %vm519 = vweird.f32 %v512
        %vm520 = vmor %vm518, %vm519
        %v521 = vsel %vm520, %v512, %v517
        %v522 = vmul.f32 %v509, %v521
        %v523 = vmul.f32 %v510, %v521
        %v524 = vmax.f32 %v522, 0.0
        %v525 = vmax.f32 %v523, 0.0
        %526 = vrot.lane.b32.xlu0 %v524, 16
        %v527 = vpop.permute.xlu0 %526
        %528 = vrot.lane.b32.xlu0 %v525, 16
        %v529 = vpop.permute.xlu0 %528
        %v530 = vsel %vm284, %v527, %v529
        %v531 = vsel %vm284, %v529, %v527
        %532 = vrot.lane.b32.xlu0 %v524, 112
        %v533 = vpop.permute.xlu0 %532
        %534 = vrot.lane.b32.xlu0 %v525, 112
        %v535 = vpop.permute.xlu0 %534
        %v536 = vsel %vm296, %v533, %v535
        %v537 = vsel %vm296, %v535, %v533
        %v538 = vsel %vm302, %v536, %v531
        %v539 = vsel %vm303, %v537, %v530
        %v540 = vsel %vm309, %v531, %v536
        %v541 = vsel %vm310, %v530, %v537
        %542 = vrot.lane.b32.xlu0 %v538, 1
        %v543 = vpop.permute.xlu0 %542
        %544 = vrot.lane.b32.xlu0 %v539, 1
        %v545 = vpop.permute.xlu0 %544
        %v546 = vsel %vm317, %v543, %v545
        %v547 = vsel %vm317, %v545, %v543
        %548 = vrot.lane.b32.xlu0 %v538, 127
        %v549 = vpop.permute.xlu0 %548
        %550 = vrot.lane.b32.xlu0 %v539, 127
        %v551 = vpop.permute.xlu0 %550
        %v552 = vsel %vm324, %v549, %v551
        %v553 = vsel %vm324, %v551, %v549
        %v554 = vsel %vm330, %v552, %v547
        %v555 = vsel %vm331, %v553, %v546
        %v556 = vsel %vm337, %v547, %v552
        %v557 = vsel %vm338, %v546, %v553
        %558 = vst [vmem:[#allocation2] sm:$0xf] %v554
        %559 = vst [vmem:[#allocation2 + $0x8] sm:$0xf] %v555
        %v562 = vrot.slane %v538, 4
        %v563 = vrot.slane %v539, 4
        %566 = vst [vmem:[#allocation2] sm:$0xf0] %v562
        %567 = vst [vmem:[#allocation2 + $0x8] sm:$0xf0] %v563
        %568 = vst [vmem:[#allocation2 + $0x10] sm:$0xf] %v556
        %569 = vst [vmem:[#allocation2 + $0x18] sm:$0xf] %v557
        %570 = vrot.lane.b32.xlu0 %v524, 1
        %v571 = vpop.permute.xlu0 %570
        %572 = vrot.lane.b32.xlu0 %v525, 1
        %v573 = vpop.permute.xlu0 %572
        %v574 = vsel %vm317, %v571, %v573
        %v575 = vsel %vm317, %v573, %v571
        %576 = vrot.lane.b32.xlu0 %v524, 127
        %v577 = vpop.permute.xlu0 %576
        %578 = vrot.lane.b32.xlu0 %v525, 127
        %v579 = vpop.permute.xlu0 %578
        %v580 = vsel %vm324, %v577, %v579
        %v581 = vsel %vm324, %v579, %v577
        %v582 = vsel %vm330, %v580, %v575
        %v583 = vsel %vm331, %v581, %v574
        %v584 = vsel %vm337, %v575, %v580
        %v585 = vsel %vm338, %v574, %v581
        %v588 = vrot.slane %v582, 4
        %v589 = vrot.slane %v583, 4
        %592 = vst [vmem:[#allocation2 + $0x10] sm:$0xf0] %v588
        %593 = vst [vmem:[#allocation2 + $0x18] sm:$0xf0] %v589
        %594 = vst [vmem:[#allocation2 + $0x20] sm:$0xf] %v524
        %595 = vst [vmem:[#allocation2 + $0x28] sm:$0xf] %v525
        %v598 = vrot.slane %v584, 4
        %v599 = vrot.slane %v585, 4
        %602 = vst [vmem:[#allocation2 + $0x20] sm:$0xf0] %v598
        %603 = vst [vmem:[#allocation2 + $0x28] sm:$0xf0] %v599
        %604 = vrot.lane.b32.xlu0 %v540, 1
        %v605 = vpop.permute.xlu0 %604
        %606 = vrot.lane.b32.xlu0 %v541, 1
        %v607 = vpop.permute.xlu0 %606
        %v608 = vsel %vm317, %v605, %v607
        %v609 = vsel %vm317, %v607, %v605
        %610 = vrot.lane.b32.xlu0 %v540, 127
        %v611 = vpop.permute.xlu0 %610
        %612 = vrot.lane.b32.xlu0 %v541, 127
        %v613 = vpop.permute.xlu0 %612
        %v614 = vsel %vm324, %v611, %v613
        %v615 = vsel %vm324, %v613, %v611
        %v616 = vsel %vm330, %v614, %v609
        %v617 = vsel %vm331, %v615, %v608
        %v618 = vsel %vm337, %v609, %v614
        %v619 = vsel %vm338, %v608, %v615
        %620 = vst [vmem:[#allocation2 + $0x30] sm:$0xf] %v616
        %621 = vst [vmem:[#allocation2 + $0x38] sm:$0xf] %v617
        %v624 = vrot.slane %v540, 4
        %v625 = vrot.slane %v541, 4
        %628 = vst [vmem:[#allocation2 + $0x30] sm:$0xf0] %v624
        %629 = vst [vmem:[#allocation2 + $0x38] sm:$0xf0] %v625
        %630 = vst [vmem:[#allocation2 + $0x40] sm:$0xf] %v618
        %631 = vst [vmem:[#allocation2 + $0x48] sm:$0xf] %v619
        %v632 = vld [vmem:[#allocation9] sm:$0xf]
        %v633 = vld [vmem:[#allocation2] sm:$0xff]
        %v634 = vld [vmem:[#allocation2 + $0x8] sm:$0xff]
        %v635 = vld [vmem:[#allocation2 + $0x10] sm:$0xff]
        %v636 = vld [vmem:[#allocation2 + $0x18] sm:$0xff]
        %v637 = vld [vmem:[#allocation2 + $0x20] sm:$0xff]
        %v638 = vld [vmem:[#allocation2 + $0x28] sm:$0xff]
        %v639 = vld [vmem:[#allocation2 + $0x30] sm:$0xff]
        %v640 = vld [vmem:[#allocation2 + $0x38] sm:$0xff]
        %v641 = vld [vmem:[#allocation2 + $0x40] sm:$0xf]
        %v642 = vld [vmem:[#allocation2 + $0x48] sm:$0xf]
        %v644 = vsel %vm441, %v632, 0
        %v647 = vsel %vm445, %v641, 0
        %v650 = vsel %vm445, %v642, 0
        %652 = vmatpush.msra.mxu0 0.0
        %653 = vmatpush.msra.mxu0 0.0
        %654 = vmatpush.msra.mxu0 0.0
        %655 = vmatpush.msra.mxu0 0.0
        %656 = vmatpush.msra.mxu0 0.0
        %657 = vmatpush.msra.mxu0 0.0
        %658 = vmatpush.msra.mxu0 0.0
        %659 = vmatpush.msra.mxu0 0.0
        %660 = vmatpush.msra.mxu0 0.0
        %661 = vmatpush.msra.mxu0 0.0
        %662 = vmatpush.msra.mxu0 0.0
        %663 = vmatpush.msra.mxu0 %v647
        %664 = vmatpush.msra.mxu0 %v639
        %665 = vmatpush.msra.mxu0 %v637
        %666 = vmatpush.msra.mxu0 %v635
        %667 = vmatpush.msra.mxu0 %v633
        %668 = vmatmul.f32.gmra.mxu0 %v644
        %v669 = vpop.f32.mrf.mxu0
        %v670 = vadd.f32 0.0, %v669
        %671 = vdwg.mxu0
        %672 = vmatpush.msra.mxu0 0.0
        %673 = vmatpush.msra.mxu0 0.0
        %674 = vmatpush.msra.mxu0 0.0
        %675 = vmatpush.msra.mxu0 0.0
        %676 = vmatpush.msra.mxu0 0.0
        %677 = vmatpush.msra.mxu0 0.0
        %678 = vmatpush.msra.mxu0 0.0
        %679 = vmatpush.msra.mxu0 0.0
        %680 = vmatpush.msra.mxu0 0.0
        %681 = vmatpush.msra.mxu0 0.0
        %682 = vmatpush.msra.mxu0 0.0
        %683 = vmatpush.msra.mxu0 %v650
        %684 = vmatpush.msra.mxu0 %v640
        %685 = vmatpush.msra.mxu0 %v638
        %686 = vmatpush.msra.mxu0 %v636
        %687 = vmatpush.msra.mxu0 %v634
        %688 = vmatmul.f32.gmra.mxu0 %v644
        %v689 = vpop.f32.mrf.mxu0
        %v690 = vadd.f32 0.0, %v689
        %691 = vdwg.mxu0
        %v692 = vsel %vm445, %v670, 0.0
        %v693 = vsel %vm445, %v690, 0.0
        %v694 = vadd.f32 %v692, %v693
        %695 = vadd.xlane.f32.xlu0 %v694
        %v696 = vpop.xlane.xlu0 %695
        %v697 = vmul.f32 %v670, %v670
        %v698 = vmul.f32 %v690, %v690
        %v699 = vsel %vm445, %v697, 0.0
        %v700 = vsel %vm445, %v698, 0.0
        %v701 = vadd.f32 %v699, %v700
        %702 = vadd.xlane.f32.xlu0 %v701
        %v703 = vpop.xlane.xlu0 %702
        %v704 = vmul.f32 %v696, 0.00390625
        %v705 = vmul.f32 %v703, 0.00390625
        %v706 = vmul.f32 %v704, %v704
        %v707 = vsub.f32 %v705, %v706
        %v708 = vmax.f32 %v707, 0.0
        %v709 = vsub.f32 %v670, %v704
        %v710 = vsub.f32 %v690, %v704
        %v711 = vadd.f32 %v708, 1e-05
        %v712 = vrsqrt.pop %v711
        %v713 = vmul.f32 %v712, %v711
        %v714 = vmul.f32 %v713, %v712
        %v715 = vmul.f32 0.5, %v714
        %v716 = vsub.f32 1.5, %v715
        %v717 = vmul.f32 %v712, %v716
        %vm718 = vweird.f32 %v711
        %vm719 = vweird.f32 %v712
        %vm720 = vmor %vm718, %vm719
        %v721 = vsel %vm720, %v712, %v717
        %v722 = vmul.f32 %v709, %v721
        %v723 = vmul.f32 %v710, %v721
        %v726 = vrot.slane %v723, 4
        %v727 = vsel %vm445, %v722, %v726
        %v729 = vadd.f32 %v260, %v727
        %730 = vst [vmem:[%s259] sm:$0xff] %v729
        %s731 = sand.u32 %s120, 1
        %s732 = scalar_lea.sflag [#allocation5], %s731
        %s733 = sand.u32 %s120, 1
        %s734 = smul.addr %s733, 8
        %s735 = scalar_lea.vmem [#allocation11], %s734
        // Predicated region
        $region53: #{tpu_custom_call.1} parent=35 // pred_check
          %p736 = pneg %p130
        $region54: #{tpu_custom_call.1} parent=35 // pred_check_branch
          %738 = sbr.rel (%p736) target = $region56
        $region55: #{tpu_custom_call.1} parent=35 // pred_region
          %740 = vsyncadd %s732, 0
          %s741 = smul.addr %s23, 2
          %s742 = smul.addr %s741, 4
          %s743 = scalar_lea.hbm %s4, %s742
          %s745 = sshll.u32 %s735, 4
          %s746 = int_to_ptr.vmem [resolvable:$true] %s745
          %s747 = sshll.u32 %s743, 4
          %s748 = int_to_ptr.hbm [resolvable:$true] %s747
          %750 = dma.vmem_to_hbm [thread:$0]  %s746, 128, %s748, %s732
        $region56: #{tpu_custom_call.1} parent=35 // pred_fallthru
          _
      $region36: #{tpu_custom_call.1} parent=5 // pred_fallthru
        _
      %p751 = scmp.le.s32.totalorder 2, %s18
      // Predicated region
      $region57: #{tpu_custom_call.1} parent=5 // pred_check
        %p752 = pneg %p751
      $region58: #{tpu_custom_call.1} parent=5 // pred_check_branch
        %754 = sbr.rel (%p752) target = $region60
      $region59: #{tpu_custom_call.1} parent=5 // pred_region
        %s755 = ssub.s32 %s18, 2
        // Predicated region
        $region61: #{tpu_custom_call.1} parent=59 // pred_check
          %p756 = pneg %p136
        $region62: #{tpu_custom_call.1} parent=59 // pred_check_branch
          %758 = sbr.rel (%p756) target = $region64
        $region63: #{tpu_custom_call.1} parent=59 // pred_region
          %s759 = sand.u32 %s121, 1
          %s760 = scalar_lea.sflag [#allocation5], %s759
          %s761 = sand.u32 %s121, 1
          %s762 = smul.addr %s761, 8
          %s763 = scalar_lea.vmem [#allocation11], %s762
          %765 = dma.done %s760, 128
        $region64: #{tpu_custom_call.1} parent=59 // pred_fallthru
          _
      $region60: #{tpu_custom_call.1} parent=5 // pred_fallthru
        _
    $region6: #{tpu_custom_call.1} parent=1 // loop_footer
      %s22 = sadd.s32 1, %s18
    $region7: #{tpu_custom_call.1} parent=1 // loop_footer_branch
      %17 = sbr.rel target = $region3
    $region8: #{tpu_custom_call.1} parent=1 // loop_exit
      _
    %766 = vsyncpa [#allocation4], 1
    %s767 = scalar_lea.sflag [#allocation4], 1
    %768 = vsyncpa %s767, 1
    %769 = vsyncpa [#allocation7], 1
    %s770 = scalar_lea.sflag [#allocation7], 1
    %771 = vsyncpa %s770, 1
    %772 = vsyncpa [#allocation10], 1
    %773 = vsyncpa [#allocation5], 1
    %s774 = scalar_lea.sflag [#allocation5], 1
    %775 = vsyncpa %s774, 1

</llo_original>
